<compile_context>
chip_gen: v7x
topology: tpu7x:2x2x1
jax: 0.10.0
libtpu: 0.0.40
codegen_flags: <defaults>
</compile_context>

<pallas_src>
import functools

import jax
import jax.numpy as jnp
from jax.experimental import pallas as pl
from jax.experimental.pallas import tpu as pltpu

SEQ = 8
BATCH = 2
INPUT = 64
HIDDEN = 128


def rnn_kernel(x_ref, wih_ref, whh_ref, b_ref, h_out_ref, *, seq, batch_pad):
    hid = whh_ref.shape[1]

    # Prologue: project all timesteps with one big MXU pass (M = seq*batch_pad)
    # and fold in the fused bias. Entirely off the serial dependency chain.
    xw = (
        jnp.dot(x_ref[...], wih_ref[...], preferred_element_type=jnp.float32)
        + b_ref[...]                       # (1, HIDDEN) broadcasts
    )                                      # (seq * batch_pad, HIDDEN)

    whh = whh_ref[...]                     # (HIDDEN, HIDDEN), loaded once
    h = jnp.zeros((batch_pad, hid), jnp.float32)

    # Serial recurrence, fully unrolled (seq is tiny and static). Only the
    # (batch_pad, HIDDEN) @ (HIDDEN, HIDDEN) matmul is on the critical path;
    # the tanh lands on the EUP slot, the add on the VPU.
    for t in range(seq):
        xw_t = xw[t * batch_pad:(t + 1) * batch_pad, :]   # sublane-aligned slice
        h = jnp.tanh(
            jnp.dot(h, whh, preferred_element_type=jnp.float32) + xw_t
        )

    h_out_ref[...] = h.astype(h_out_ref.dtype)


def rnn_simplified_forward(x, w_ih, w_hh, b_ih, b_hh):
    """x: (seq, batch, input). Returns hidden: (1, batch, hidden)."""
    seq, batch, inp = x.shape
    hid = w_hh.shape[0]

    # Pad batch up to the f32 sublane width (8) so all blocks are (8,128)-friendly.
    bp = max(8, ((batch + 7) // 8) * 8)

    # Wrapper-side glue: pre-transpose weights, fuse the two biases, pad the
    # batch dim, and flatten x to (seq*batch_pad, input) so the kernel's
    # prologue matmul handles all timesteps in a single MXU pass.
    w_ih_t = jnp.asarray(w_ih.T, jnp.float32)                     # (INPUT, HIDDEN)
    w_hh_t = jnp.asarray(w_hh.T, jnp.float32)                     # (HIDDEN, HIDDEN)
    b = (b_ih + b_hh).reshape(1, hid).astype(jnp.float32)         # (1, HIDDEN)
    x_pad = jnp.zeros((seq, bp, inp), jnp.float32).at[:, :batch, :].set(
        x.astype(jnp.float32)
    )
    x_flat = x_pad.reshape(seq * bp, inp)                         # (seq*bp, INPUT)

    kernel = functools.partial(rnn_kernel, seq=seq, batch_pad=bp)

    h_final = pl.pallas_call(
        kernel,
        out_shape=jax.ShapeDtypeStruct((bp, hid), jnp.float32),
        # Single invocation: whole arrays resident in VMEM (~65 KB total).
        in_specs=[
            pl.BlockSpec(memory_space=pltpu.MemorySpace.VMEM),  # x_flat
            pl.BlockSpec(memory_space=pltpu.MemorySpace.VMEM),  # W_ih^T
            pl.BlockSpec(memory_space=pltpu.MemorySpace.VMEM),  # W_hh^T
            pl.BlockSpec(memory_space=pltpu.MemorySpace.VMEM),  # fused bias
        ],
        out_specs=pl.BlockSpec(memory_space=pltpu.MemorySpace.VMEM),
    )(x_flat, w_ih_t, w_hh_t, b)

    # Drop batch padding; torch.nn.RNN returns hidden with a leading num_layers dim.
    return h_final[None, :batch, :]


def reference_forward(x, w_ih, w_hh, b_ih, b_hh):
    """Pure-JAX reference matching torch.nn.RNN forward (tanh, 1 layer)."""
    def step(h, x_t):
        h_new = jnp.tanh(x_t @ w_ih.T + b_ih + h @ w_hh.T + b_hh)
        return h_new, None

    h0 = jnp.zeros((x.shape[1], w_ih.shape[0]), jnp.float32)
    h_final, _ = jax.lax.scan(step, h0, x)
    return h_final[None, :, :]


if __name__ == "__main__":
    # Deterministic example: all keys derived from PRNGKey(0).
    root = jax.random.PRNGKey(0)
    k0, k1, k2, k3, k4 = jax.random.split(root, 5)

    # Parameters match torch.nn.RNN's init: uniform(-k, k), k = 1/sqrt(hidden).
    k = 1.0 / jnp.sqrt(jnp.float32(HIDDEN))
    w_ih = jax.random.uniform(k1, (HIDDEN, INPUT), jnp.float32, -k, k)
    w_hh = jax.random.uniform(k2, (HIDDEN, HIDDEN), jnp.float32, -k, k)
    b_ih = jax.random.uniform(k3, (HIDDEN,), jnp.float32, -k, k)
    b_hh = jax.random.uniform(k4, (HIDDEN,), jnp.float32, -k, k)

    # Input: (seq, batch, input) — PyTorch RNN default (batch_first=False) layout.
    x = jax.random.normal(k0, (SEQ, BATCH, INPUT), jnp.float32)

    hidden = rnn_simplified_forward(x, w_ih, w_hh, b_ih, b_hh)
    hidden = jax.block_until_ready(hidden)

    ref = reference_forward(x, w_ih, w_hh, b_ih, b_hh)
    assert hidden.shape == (1, BATCH, HIDDEN), hidden.shape
    assert jnp.allclose(hidden, ref, atol=1e-5, rtol=1e-5), "mismatch vs reference"

    print("KERNEL_OK")
</pallas_src>

<mosaic_0001>
module attributes {stable_mosaic.version = 11 : i64} {
  func.func @rnn_kernel(%arg0: memref<64x64xf32, #tpu.memory_space<vmem>>, %arg1: memref<64x128xf32, #tpu.memory_space<vmem>>, %arg2: memref<128x128xf32, #tpu.memory_space<vmem>>, %arg3: memref<1x128xf32, #tpu.memory_space<vmem>>, %arg4: memref<8x128xf32, #tpu.memory_space<vmem>>) attributes {dimension_semantics = [], scalar_prefetch = 0 : i64, scratch_operands = 0 : i64, tpu.core_type = #tpu.core_type<tc>} {
    %c0 = arith.constant 0 : index
    %c0_0 = arith.constant 0 : index
    %0 = vector.load %arg0[%c0, %c0_0] : memref<64x64xf32, #tpu.memory_space<vmem>>, vector<64x64xf32>
    %c0_1 = arith.constant 0 : index
    %c0_2 = arith.constant 0 : index
    %1 = vector.load %arg1[%c0_1, %c0_2] : memref<64x128xf32, #tpu.memory_space<vmem>>, vector<64x128xf32>
    %cst = arith.constant dense<0.000000e+00> : vector<64x128xf32>
    %2 = tpu.matmul %0, %1, %cst {dimension_numbers = #tpu.dot_dimension_numbers<[1], [0], [0], [1], [0, 0, 1, 1], [], []>} : vector<64x64xf32>, vector<64x128xf32>, vector<64x128xf32> -> vector<64x128xf32>
    %c0_3 = arith.constant 0 : index
    %c0_4 = arith.constant 0 : index
    %3 = vector.load %arg3[%c0_3, %c0_4] : memref<1x128xf32, #tpu.memory_space<vmem>>, vector<1x128xf32>
    %4 = vector.broadcast %3 : vector<1x128xf32> to vector<64x128xf32>
    %5 = arith.addf %2, %4 : vector<64x128xf32>
    %c0_5 = arith.constant 0 : index
    %c0_6 = arith.constant 0 : index
    %6 = vector.load %arg2[%c0_5, %c0_6] : memref<128x128xf32, #tpu.memory_space<vmem>>, vector<128x128xf32>
    %cst_7 = arith.constant 0.000000e+00 : f32
    %7 = vector.broadcast %cst_7 : f32 to vector<8x128xf32>
    %8 = vector.extract_strided_slice %5 {offsets = [0, 0], sizes = [8, 128], strides = [1, 1]} : vector<64x128xf32> to vector<8x128xf32>
    %cst_8 = arith.constant dense<0.000000e+00> : vector<8x128xf32>
    %9 = tpu.matmul %7, %6, %cst_8 {dimension_numbers = #tpu.dot_dimension_numbers<[1], [0], [0], [1], [0, 0, 1, 1], [], []>} : vector<8x128xf32>, vector<128x128xf32>, vector<8x128xf32> -> vector<8x128xf32>
    %10 = arith.addf %9, %8 : vector<8x128xf32>
    %11 = math.tanh %10 : vector<8x128xf32>
    %12 = vector.extract_strided_slice %5 {offsets = [8, 0], sizes = [8, 128], strides = [1, 1]} : vector<64x128xf32> to vector<8x128xf32>
    %cst_9 = arith.constant dense<0.000000e+00> : vector<8x128xf32>
    %13 = tpu.matmul %11, %6, %cst_9 {dimension_numbers = #tpu.dot_dimension_numbers<[1], [0], [0], [1], [0, 0, 1, 1], [], []>} : vector<8x128xf32>, vector<128x128xf32>, vector<8x128xf32> -> vector<8x128xf32>
    %14 = arith.addf %13, %12 : vector<8x128xf32>
    %15 = math.tanh %14 : vector<8x128xf32>
    %16 = vector.extract_strided_slice %5 {offsets = [16, 0], sizes = [8, 128], strides = [1, 1]} : vector<64x128xf32> to vector<8x128xf32>
    %cst_10 = arith.constant dense<0.000000e+00> : vector<8x128xf32>
    %17 = tpu.matmul %15, %6, %cst_10 {dimension_numbers = #tpu.dot_dimension_numbers<[1], [0], [0], [1], [0, 0, 1, 1], [], []>} : vector<8x128xf32>, vector<128x128xf32>, vector<8x128xf32> -> vector<8x128xf32>
    %18 = arith.addf %17, %16 : vector<8x128xf32>
    %19 = math.tanh %18 : vector<8x128xf32>
    %20 = vector.extract_strided_slice %5 {offsets = [24, 0], sizes = [8, 128], strides = [1, 1]} : vector<64x128xf32> to vector<8x128xf32>
    %cst_11 = arith.constant dense<0.000000e+00> : vector<8x128xf32>
    %21 = tpu.matmul %19, %6, %cst_11 {dimension_numbers = #tpu.dot_dimension_numbers<[1], [0], [0], [1], [0, 0, 1, 1], [], []>} : vector<8x128xf32>, vector<128x128xf32>, vector<8x128xf32> -> vector<8x128xf32>
    %22 = arith.addf %21, %20 : vector<8x128xf32>
    %23 = math.tanh %22 : vector<8x128xf32>
    %24 = vector.extract_strided_slice %5 {offsets = [32, 0], sizes = [8, 128], strides = [1, 1]} : vector<64x128xf32> to vector<8x128xf32>
    %cst_12 = arith.constant dense<0.000000e+00> : vector<8x128xf32>
    %25 = tpu.matmul %23, %6, %cst_12 {dimension_numbers = #tpu.dot_dimension_numbers<[1], [0], [0], [1], [0, 0, 1, 1], [], []>} : vector<8x128xf32>, vector<128x128xf32>, vector<8x128xf32> -> vector<8x128xf32>
    %26 = arith.addf %25, %24 : vector<8x128xf32>
    %27 = math.tanh %26 : vector<8x128xf32>
    %28 = vector.extract_strided_slice %5 {offsets = [40, 0], sizes = [8, 128], strides = [1, 1]} : vector<64x128xf32> to vector<8x128xf32>
    %cst_13 = arith.constant dense<0.000000e+00> : vector<8x128xf32>
    %29 = tpu.matmul %27, %6, %cst_13 {dimension_numbers = #tpu.dot_dimension_numbers<[1], [0], [0], [1], [0, 0, 1, 1], [], []>} : vector<8x128xf32>, vector<128x128xf32>, vector<8x128xf32> -> vector<8x128xf32>
    %30 = arith.addf %29, %28 : vector<8x128xf32>
    %31 = math.tanh %30 : vector<8x128xf32>
    %32 = vector.extract_strided_slice %5 {offsets = [48, 0], sizes = [8, 128], strides = [1, 1]} : vector<64x128xf32> to vector<8x128xf32>
    %cst_14 = arith.constant dense<0.000000e+00> : vector<8x128xf32>
    %33 = tpu.matmul %31, %6, %cst_14 {dimension_numbers = #tpu.dot_dimension_numbers<[1], [0], [0], [1], [0, 0, 1, 1], [], []>} : vector<8x128xf32>, vector<128x128xf32>, vector<8x128xf32> -> vector<8x128xf32>
    %34 = arith.addf %33, %32 : vector<8x128xf32>
    %35 = math.tanh %34 : vector<8x128xf32>
    %36 = vector.extract_strided_slice %5 {offsets = [56, 0], sizes = [8, 128], strides = [1, 1]} : vector<64x128xf32> to vector<8x128xf32>
    %cst_15 = arith.constant dense<0.000000e+00> : vector<8x128xf32>
    %37 = tpu.matmul %35, %6, %cst_15 {dimension_numbers = #tpu.dot_dimension_numbers<[1], [0], [0], [1], [0, 0, 1, 1], [], []>} : vector<8x128xf32>, vector<128x128xf32>, vector<8x128xf32> -> vector<8x128xf32>
    %38 = arith.addf %37, %36 : vector<8x128xf32>
    %39 = math.tanh %38 : vector<8x128xf32>
    %c0_16 = arith.constant 0 : index
    %c0_17 = arith.constant 0 : index
    %40 = vector.load %arg4[%c0_16, %c0_17] : memref<8x128xf32, #tpu.memory_space<vmem>>, vector<8x128xf32>
    tpu.vector_store %arg4[%c0_16, %c0_17], %39 {strides = array<i32>} : memref<8x128xf32, #tpu.memory_space<vmem>>, vector<8x128xf32>,
    return
  }
}

</mosaic_0001>

<llo_original>
// kernel: tpu_custom_call.1
$region0: #{tpu_custom_call.1}
  #allocation0 [shape = 'u32[]', space=smem, size = 0x4, offset = 0x4, fixed_abs, tag = 'smem constant byte address 0x4 - core index']
  #allocation1 [shape = 'u32[144,128]{1,0:T(1,128)}', space=vmem, size = 0x12000, scoped, tag = 'internal scratch']
  %s0 = inlined_call_operand.hbm [shape: f32[64,64], index: 0, kind: input, shape index: {}]
  %s1 = inlined_call_operand.hbm [shape: f32[64,128], index: 1, kind: input, shape index: {}]
  %s2 = inlined_call_operand.hbm [shape: f32[128,128], index: 2, kind: input, shape index: {}]
  %s3 = inlined_call_operand.vmem [shape: f32[1,128], index: 3, kind: input, shape index: {}]
  %s4 = inlined_call_operand.hbm [shape: f32[8,128], index: 4, kind: output, shape index: {}]
  %s5 = sld [smem:[#allocation0]]
  $region38: #{tpu_custom_call.1} parent=0
    _
  %s7 = ssub.s32 1, %s5
  %s8 = scalar_select 0, %s7, %s5
  $region1: #{tpu_custom_call.1} parent=0
    #allocation2 [shape = 'u8[32768]{0}', space=vmem, size = 0x8000, scoped, tag = 'input window, operand 0, single buffered']
    #allocation3 [shape = 's32[1]{0}', space=sflag, size = 0x4, scoped, tag = 'scoped memory for tpu_custom_call.1']
    #allocation4 [shape = 's32[1]{0}', space=sflag, size = 0x4, scoped, tag = 'scoped memory for tpu_custom_call.1']
    #allocation5 [shape = 'u8[32768]{0}', space=vmem, size = 0x8000, scoped, tag = 'input window, operand 1, single buffered']
    #allocation6 [shape = 's32[1]{0}', space=sflag, size = 0x4, scoped, tag = 'scoped memory for tpu_custom_call.1']
    #allocation7 [shape = 'u8[65536]{0}', space=vmem, size = 0x10000, scoped, tag = 'input window, operand 2, single buffered']
    #allocation8 [shape = 'u8[4096]{0}', space=vmem, size = 0x1000, scoped, tag = 'output window, operand 0, single buffered']
    %9 = vsyncpa [#allocation3], 0
    %10 = vsyncpa [#allocation6], 0
    %11 = vsyncpa [#allocation4], 0
    // Predicated region
    $region2: #{tpu_custom_call.1} parent=1 // pred_check
      _
    $region3: #{tpu_custom_call.1} parent=1 // pred_check_branch
      %13 = sbr.rel (0) target = $region5
    $region4: #{tpu_custom_call.1} parent=1 // pred_region
      %s15 = ssub.s32 1024, 1024
      %16 = vsyncadd [#allocation3], %s15
      %s17 = sshll.u32 [#allocation2], 4
      %s18 = int_to_ptr.vmem [resolvable:$true] %s17
      %23 = dma.hbm_to_vmem [thread:$0]  %s0, 1024, %s18, [#allocation3], 128, 128, 8
    $region5: #{tpu_custom_call.1} parent=1 // pred_fallthru
      _
    // Predicated region
    $region6: #{tpu_custom_call.1} parent=1 // pred_check
      _
    $region7: #{tpu_custom_call.1} parent=1 // pred_check_branch
      %25 = sbr.rel (0) target = $region9
    $region8: #{tpu_custom_call.1} parent=1 // pred_region
      %s27 = ssub.s32 1024, 1024
      %28 = vsyncadd [#allocation6], %s27
      %s29 = sshll.u32 [#allocation5], 4
      %s30 = int_to_ptr.vmem [resolvable:$true] %s29
      %35 = dma.hbm_to_vmem [thread:$0]  %s1, 1024, %s30, [#allocation6], 128, 128, 8
    $region9: #{tpu_custom_call.1} parent=1 // pred_fallthru
      _
    // Predicated region
    $region10: #{tpu_custom_call.1} parent=1 // pred_check
      _
    $region11: #{tpu_custom_call.1} parent=1 // pred_check_branch
      %37 = sbr.rel (0) target = $region13
    $region12: #{tpu_custom_call.1} parent=1 // pred_region
      %s39 = ssub.s32 2048, 2048
      %40 = vsyncadd [#allocation6], %s39
      %s41 = sshll.u32 [#allocation7], 4
      %s42 = int_to_ptr.vmem [resolvable:$true] %s41
      %47 = dma.hbm_to_vmem [thread:$0]  %s2, 2048, %s42, [#allocation6], 128, 128, 8
    $region13: #{tpu_custom_call.1} parent=1 // pred_fallthru
      _
    // Predicated region
    $region14: #{tpu_custom_call.1} parent=1 // pred_check
      _
    $region15: #{tpu_custom_call.1} parent=1 // pred_check_branch
      %49 = sbr.rel (0) target = $region17
    $region16: #{tpu_custom_call.1} parent=1 // pred_region
      _
    $region17: #{tpu_custom_call.1} parent=1 // pred_fallthru
      _
    // Predicated region
    $region18: #{tpu_custom_call.1} parent=1 // pred_check
      _
    $region19: #{tpu_custom_call.1} parent=1 // pred_check_branch
      %51 = sbr.rel (0) target = $region21
    $region20: #{tpu_custom_call.1} parent=1 // pred_region
      %52 = dma.done [#allocation3], 1024
    $region21: #{tpu_custom_call.1} parent=1 // pred_fallthru
      _
    // Predicated region
    $region22: #{tpu_custom_call.1} parent=1 // pred_check
      _
    $region23: #{tpu_custom_call.1} parent=1 // pred_check_branch
      %54 = sbr.rel (0) target = $region25
    $region24: #{tpu_custom_call.1} parent=1 // pred_region
      %55 = dma.done [#allocation6], 1024
    $region25: #{tpu_custom_call.1} parent=1 // pred_fallthru
      _
    // Predicated region
    $region26: #{tpu_custom_call.1} parent=1 // pred_check
      _
    $region27: #{tpu_custom_call.1} parent=1 // pred_check_branch
      %57 = sbr.rel (0) target = $region29
    $region28: #{tpu_custom_call.1} parent=1 // pred_region
      %58 = dma.done [#allocation6], 2048
    $region29: #{tpu_custom_call.1} parent=1 // pred_fallthru
      _
    %v59 = vld [vmem:[#allocation2] sm:$0xff]
    %v60 = vld [vmem:[#allocation2 + $0x8] sm:$0xff]
    %v61 = vld [vmem:[#allocation2 + $0x10] sm:$0xff]
    %v62 = vld [vmem:[#allocation2 + $0x18] sm:$0xff]
    %v63 = vld [vmem:[#allocation2 + $0x20] sm:$0xff]
    %v64 = vld [vmem:[#allocation2 + $0x28] sm:$0xff]
    %v65 = vld [vmem:[#allocation2 + $0x30] sm:$0xff]
    %v66 = vld [vmem:[#allocation2 + $0x38] sm:$0xff]
    %v67 = vld [vmem:[#allocation5] sm:$0xff]
    %v68 = vld [vmem:[#allocation5 + $0x8] sm:$0xff]
    %v69 = vld [vmem:[#allocation5 + $0x10] sm:$0xff]
    %v70 = vld [vmem:[#allocation5 + $0x18] sm:$0xff]
    %v71 = vld [vmem:[#allocation5 + $0x20] sm:$0xff]
    %v72 = vld [vmem:[#allocation5 + $0x28] sm:$0xff]
    %v73 = vld [vmem:[#allocation5 + $0x30] sm:$0xff]
    %v74 = vld [vmem:[#allocation5 + $0x38] sm:$0xff]
    %v75 = vld [vmem:[%s3] sm:$0x1]
    %v77 = vlaneseq
    %v78 = vshrl.u32 %v77, 7
    %v79 = vsub.s32 0, %v78
    %v80 = vrot.slane %v75, %v79
    %vm82 = vcmask 523264
    %v84 = vsel %vm82, %v59, 0
    %v87 = vsel %vm82, %v60, 0
    %v90 = vsel %vm82, %v61, 0
    %v93 = vsel %vm82, %v62, 0
    %v96 = vsel %vm82, %v63, 0
    %v99 = vsel %vm82, %v64, 0
    %v102 = vsel %vm82, %v65, 0
    %v105 = vsel %vm82, %v66, 0
    %107 = vmatprep.subr.mxu0 0.0
    %108 = vmatpush1.msra.mxu0 %v67
    %109 = vmatprep.subr.mxu0 0.0
    %110 = vmatpush1.msra.mxu0 %v68
    %111 = vmatprep.subr.mxu0 0.0
    %112 = vmatpush1.msra.mxu0 %v69
    %113 = vmatprep.subr.mxu0 0.0
    %114 = vmatpush1.msra.mxu0 %v70
    %115 = vmatprep.subr.mxu0 0.0
    %116 = vmatpush1.msra.mxu0 %v71
    %117 = vmatprep.subr.mxu0 0.0
    %118 = vmatpush1.msra.mxu0 %v72
    %119 = vmatprep.subr.mxu0 0.0
    %120 = vmatpush1.msra.mxu0 %v73
    %121 = vmatprep.subr.mxu0 0.0
    %122 = vmatpush1.msra.mxu0 %v74
    %123 = vmatprep.subr.mxu0 0.0
    %124 = vmatpush1.msra.mxu0 0.0
    %125 = vmatprep.subr.mxu0 0.0
    %126 = vmatpush1.msra.mxu0 0.0
    %127 = vmatprep.subr.mxu0 0.0
    %128 = vmatpush1.msra.mxu0 0.0
    %129 = vmatprep.subr.mxu0 0.0
    %130 = vmatpush1.msra.mxu0 0.0
    %131 = vmatprep.subr.mxu0 0.0
    %132 = vmatpush1.msra.mxu0 0.0
    %133 = vmatprep.subr.mxu0 0.0
    %134 = vmatpush1.msra.mxu0 0.0
    %135 = vmatprep.subr.mxu0 0.0
    %136 = vmatpush1.msra.mxu0 0.0
    %137 = vmatprep.subr.mxu0 0.0
    %138 = vmatpush1.msra.mxu0 0.0
    %139 = vmatprep.subr.mxu0 0.0
    %140 = vmatpush1.msra.mxu0 0.0
    %141 = vmatprep.subr.mxu0 0.0
    %142 = vmatpush1.msra.mxu0 0.0
    %143 = vmatprep.subr.mxu0 0.0
    %144 = vmatpush1.msra.mxu0 0.0
    %145 = vmatprep.subr.mxu0 0.0
    %146 = vmatpush1.msra.mxu0 0.0
    %147 = vmatprep.subr.mxu0 0.0
    %148 = vmatpush1.msra.mxu0 0.0
    %149 = vmatprep.subr.mxu0 0.0
    %150 = vmatpush1.msra.mxu0 0.0
    %151 = vmatprep.subr.mxu0 0.0
    %152 = vmatpush1.msra.mxu0 0.0
    %153 = vmatprep.subr.mxu0 0.0
    %154 = vmatpush1.msra.mxu0 0.0
    %155 = vmatprep.subr.mxu0 0.0
    %156 = vmatpush1.msra.mxu0 0.0
    %157 = vmatprep.subr.mxu0 0.0
    %158 = vmatpush1.msra.mxu0 0.0
    %159 = vmatprep.subr.mxu0 0.0
    %160 = vmatpush1.msra.mxu0 0.0
    %161 = vmatprep.subr.mxu0 0.0
    %162 = vmatpush1.msra.mxu0 0.0
    %163 = vmatprep.subr.mxu0 0.0
    %164 = vmatpush1.msra.mxu0 0.0
    %165 = vmatprep.subr.mxu0 0.0
    %166 = vmatpush1.msra.mxu0 0.0
    %167 = vmatprep.subr.mxu0 0.0
    %168 = vmatpush1.msra.mxu0 0.0
    %169 = vmatprep.subr.mxu0 0.0
    %170 = vmatpush1.msra.mxu0 0.0
    %171 = vmatprep.mubr.f32.mxu0 0.0
    %172 = vmatmul.mubr.f32.gmra.mrb[0].mxu0 %v84
    %v173 = vpop.f32.mrb[0].mxu0
    %v174 = vadd.f32 %v80, %v173
    %v175 = vpop.f32.mrb[0].mxu0
    %176 = vmatprep.mubr.f32.mxu0 0.0
    %177 = vmatmul.mubr.f32.gmra.mrb[0].mxu0 %v87
    %v178 = vpop.f32.mrb[0].mxu0
    %v179 = vadd.f32 %v80, %v178
    %v180 = vpop.f32.mrb[0].mxu0
    %181 = vmatprep.mubr.f32.mxu0 0.0
    %182 = vmatmul.mubr.f32.gmra.mrb[0].mxu0 %v90
    %v183 = vpop.f32.mrb[0].mxu0
    %v184 = vadd.f32 %v80, %v183
    %v185 = vpop.f32.mrb[0].mxu0
    %186 = vmatprep.mubr.f32.mxu0 0.0
    %187 = vmatmul.mubr.f32.gmra.mrb[0].mxu0 %v93
    %v188 = vpop.f32.mrb[0].mxu0
    %v189 = vadd.f32 %v80, %v188
    %v190 = vpop.f32.mrb[0].mxu0
    %191 = vmatprep.mubr.f32.mxu0 0.0
    %192 = vmatmul.mubr.f32.gmra.mrb[0].mxu0 %v96
    %v193 = vpop.f32.mrb[0].mxu0
    %v194 = vadd.f32 %v80, %v193
    %v195 = vpop.f32.mrb[0].mxu0
    %196 = vmatprep.mubr.f32.mxu0 0.0
    %197 = vmatmul.mubr.f32.gmra.mrb[0].mxu0 %v99
    %v198 = vpop.f32.mrb[0].mxu0
    %v199 = vadd.f32 %v80, %v198
    %v200 = vpop.f32.mrb[0].mxu0
    %201 = vmatprep.mubr.f32.mxu0 0.0
    %202 = vmatmul.mubr.f32.gmra.mrb[0].mxu0 %v102
    %v203 = vpop.f32.mrb[0].mxu0
    %v204 = vadd.f32 %v80, %v203
    %v205 = vpop.f32.mrb[0].mxu0
    %206 = vmatprep.mubr.f32.mxu0 0.0
    %207 = vmatmul.mubr.f32.gmra.mrb[0].mxu0 %v105
    %v208 = vpop.f32.mrb[0].mxu0
    %v209 = vadd.f32 %v80, %v208
    %v210 = vpop.f32.mrb[0].mxu0
    %211 = vdwg.mxu0
    %v212 = vld [vmem:[#allocation7] sm:$0xff]
    %v213 = vld [vmem:[#allocation7 + $0x8] sm:$0xff]
    %v214 = vld [vmem:[#allocation7 + $0x10] sm:$0xff]
    %v215 = vld [vmem:[#allocation7 + $0x18] sm:$0xff]
    %v216 = vld [vmem:[#allocation7 + $0x20] sm:$0xff]
    %v217 = vld [vmem:[#allocation7 + $0x28] sm:$0xff]
    %v218 = vld [vmem:[#allocation7 + $0x30] sm:$0xff]
    %v219 = vld [vmem:[#allocation7 + $0x38] sm:$0xff]
    %v220 = vld [vmem:[#allocation7 + $0x40] sm:$0xff]
    %v221 = vld [vmem:[#allocation7 + $0x48] sm:$0xff]
    %v222 = vld [vmem:[#allocation7 + $0x50] sm:$0xff]
    %v223 = vld [vmem:[#allocation7 + $0x58] sm:$0xff]
    %v224 = vld [vmem:[#allocation7 + $0x60] sm:$0xff]
    %v225 = vld [vmem:[#allocation7 + $0x68] sm:$0xff]
    %v226 = vld [vmem:[#allocation7 + $0x70] sm:$0xff]
    %v227 = vld [vmem:[#allocation7 + $0x78] sm:$0xff]
    %228 = vmatprep.subr.mxu0 0.0
    %229 = vmatpush1.msra.mxu0 %v212
    %230 = vmatprep.subr.mxu0 0.0
    %231 = vmatpush1.msra.mxu0 %v213
    %232 = vmatprep.subr.mxu0 0.0
    %233 = vmatpush1.msra.mxu0 %v214
    %234 = vmatprep.subr.mxu0 0.0
    %235 = vmatpush1.msra.mxu0 %v215
    %236 = vmatprep.subr.mxu0 0.0
    %237 = vmatpush1.msra.mxu0 %v216
    %238 = vmatprep.subr.mxu0 0.0
    %239 = vmatpush1.msra.mxu0 %v217
    %240 = vmatprep.subr.mxu0 0.0
    %241 = vmatpush1.msra.mxu0 %v218
    %242 = vmatprep.subr.mxu0 0.0
    %243 = vmatpush1.msra.mxu0 %v219
    %244 = vmatprep.subr.mxu0 0.0
    %245 = vmatpush1.msra.mxu0 %v220
    %246 = vmatprep.subr.mxu0 0.0
    %247 = vmatpush1.msra.mxu0 %v221
    %248 = vmatprep.subr.mxu0 0.0
    %249 = vmatpush1.msra.mxu0 %v222
    %250 = vmatprep.subr.mxu0 0.0
    %251 = vmatpush1.msra.mxu0 %v223
    %252 = vmatprep.subr.mxu0 0.0
    %253 = vmatpush1.msra.mxu0 %v224
    %254 = vmatprep.subr.mxu0 0.0
    %255 = vmatpush1.msra.mxu0 %v225
    %256 = vmatprep.subr.mxu0 0.0
    %257 = vmatpush1.msra.mxu0 %v226
    %258 = vmatprep.subr.mxu0 0.0
    %259 = vmatpush1.msra.mxu0 %v227
    %260 = vmatprep.subr.mxu0 0.0
    %261 = vmatpush1.msra.mxu0 0.0
    %262 = vmatprep.subr.mxu0 0.0
    %263 = vmatpush1.msra.mxu0 0.0
    %264 = vmatprep.subr.mxu0 0.0
    %265 = vmatpush1.msra.mxu0 0.0
    %266 = vmatprep.subr.mxu0 0.0
    %267 = vmatpush1.msra.mxu0 0.0
    %268 = vmatprep.subr.mxu0 0.0
    %269 = vmatpush1.msra.mxu0 0.0
    %270 = vmatprep.subr.mxu0 0.0
    %271 = vmatpush1.msra.mxu0 0.0
    %272 = vmatprep.subr.mxu0 0.0
    %273 = vmatpush1.msra.mxu0 0.0
    %274 = vmatprep.subr.mxu0 0.0
    %275 = vmatpush1.msra.mxu0 0.0
    %276 = vmatprep.subr.mxu0 0.0
    %277 = vmatpush1.msra.mxu0 0.0
    %278 = vmatprep.subr.mxu0 0.0
    %279 = vmatpush1.msra.mxu0 0.0
    %280 = vmatprep.subr.mxu0 0.0
    %281 = vmatpush1.msra.mxu0 0.0
    %282 = vmatprep.subr.mxu0 0.0
    %283 = vmatpush1.msra.mxu0 0.0
    %284 = vmatprep.subr.mxu0 0.0
    %285 = vmatpush1.msra.mxu0 0.0
    %286 = vmatprep.subr.mxu0 0.0
    %287 = vmatpush1.msra.mxu0 0.0
    %288 = vmatprep.subr.mxu0 0.0
    %289 = vmatpush1.msra.mxu0 0.0
    %290 = vmatprep.subr.mxu0 0.0
    %291 = vmatpush1.msra.mxu0 0.0
    %292 = vmatprep.mubr.f32.mxu0 0.0
    %293 = vmatmul.mubr.f32.gmra.mrb[0].mxu0 0.0
    %v294 = vpop.f32.mrb[0].mxu0
    %v295 = vadd.f32 %v174, %v294
    %v296 = vpop.f32.mrb[0].mxu0
    %297 = vdwg.mxu0
    %v298 = vtanh.pop %v295
    %299 = vmatprep.subr.mxu0 0.0
    %300 = vmatpush1.msra.mxu0 %v212
    %301 = vmatprep.subr.mxu0 0.0
    %302 = vmatpush1.msra.mxu0 %v213
    %303 = vmatprep.subr.mxu0 0.0
    %304 = vmatpush1.msra.mxu0 %v214
    %305 = vmatprep.subr.mxu0 0.0
    %306 = vmatpush1.msra.mxu0 %v215
    %307 = vmatprep.subr.mxu0 0.0
    %308 = vmatpush1.msra.mxu0 %v216
    %309 = vmatprep.subr.mxu0 0.0
    %310 = vmatpush1.msra.mxu0 %v217
    %311 = vmatprep.subr.mxu0 0.0
    %312 = vmatpush1.msra.mxu0 %v218
    %313 = vmatprep.subr.mxu0 0.0
    %314 = vmatpush1.msra.mxu0 %v219
    %315 = vmatprep.subr.mxu0 0.0
    %316 = vmatpush1.msra.mxu0 %v220
    %317 = vmatprep.subr.mxu0 0.0
    %318 = vmatpush1.msra.mxu0 %v221
    %319 = vmatprep.subr.mxu0 0.0
    %320 = vmatpush1.msra.mxu0 %v222
    %321 = vmatprep.subr.mxu0 0.0
    %322 = vmatpush1.msra.mxu0 %v223
    %323 = vmatprep.subr.mxu0 0.0
    %324 = vmatpush1.msra.mxu0 %v224
    %325 = vmatprep.subr.mxu0 0.0
    %326 = vmatpush1.msra.mxu0 %v225
    %327 = vmatprep.subr.mxu0 0.0
    %328 = vmatpush1.msra.mxu0 %v226
    %329 = vmatprep.subr.mxu0 0.0
    %330 = vmatpush1.msra.mxu0 %v227
    %331 = vmatprep.subr.mxu0 0.0
    %332 = vmatpush1.msra.mxu0 0.0
    %333 = vmatprep.subr.mxu0 0.0
    %334 = vmatpush1.msra.mxu0 0.0
    %335 = vmatprep.subr.mxu0 0.0
    %336 = vmatpush1.msra.mxu0 0.0
    %337 = vmatprep.subr.mxu0 0.0
    %338 = vmatpush1.msra.mxu0 0.0
    %339 = vmatprep.subr.mxu0 0.0
    %340 = vmatpush1.msra.mxu0 0.0
    %341 = vmatprep.subr.mxu0 0.0
    %342 = vmatpush1.msra.mxu0 0.0
    %343 = vmatprep.subr.mxu0 0.0
    %344 = vmatpush1.msra.mxu0 0.0
    %345 = vmatprep.subr.mxu0 0.0
    %346 = vmatpush1.msra.mxu0 0.0
    %347 = vmatprep.subr.mxu0 0.0
    %348 = vmatpush1.msra.mxu0 0.0
    %349 = vmatprep.subr.mxu0 0.0
    %350 = vmatpush1.msra.mxu0 0.0
    %351 = vmatprep.subr.mxu0 0.0
    %352 = vmatpush1.msra.mxu0 0.0
    %353 = vmatprep.subr.mxu0 0.0
    %354 = vmatpush1.msra.mxu0 0.0
    %355 = vmatprep.subr.mxu0 0.0
    %356 = vmatpush1.msra.mxu0 0.0
    %357 = vmatprep.subr.mxu0 0.0
    %358 = vmatpush1.msra.mxu0 0.0
    %359 = vmatprep.subr.mxu0 0.0
    %360 = vmatpush1.msra.mxu0 0.0
    %361 = vmatprep.subr.mxu0 0.0
    %362 = vmatpush1.msra.mxu0 0.0
    %363 = vmatprep.mubr.f32.mxu0 0.0
    %364 = vmatmul.mubr.f32.gmra.mrb[0].mxu0 %v298
    %v365 = vpop.f32.mrb[0].mxu0
    %v366 = vadd.f32 %v179, %v365
    %v367 = vpop.f32.mrb[0].mxu0
    %368 = vdwg.mxu0
    %v369 = vtanh.pop %v366
    %370 = vmatprep.subr.mxu0 0.0
    %371 = vmatpush1.msra.mxu0 %v212
    %372 = vmatprep.subr.mxu0 0.0
    %373 = vmatpush1.msra.mxu0 %v213
    %374 = vmatprep.subr.mxu0 0.0
    %375 = vmatpush1.msra.mxu0 %v214
    %376 = vmatprep.subr.mxu0 0.0
    %377 = vmatpush1.msra.mxu0 %v215
    %378 = vmatprep.subr.mxu0 0.0
    %379 = vmatpush1.msra.mxu0 %v216
    %380 = vmatprep.subr.mxu0 0.0
    %381 = vmatpush1.msra.mxu0 %v217
    %382 = vmatprep.subr.mxu0 0.0
    %383 = vmatpush1.msra.mxu0 %v218
    %384 = vmatprep.subr.mxu0 0.0
    %385 = vmatpush1.msra.mxu0 %v219
    %386 = vmatprep.subr.mxu0 0.0
    %387 = vmatpush1.msra.mxu0 %v220
    %388 = vmatprep.subr.mxu0 0.0
    %389 = vmatpush1.msra.mxu0 %v221
    %390 = vmatprep.subr.mxu0 0.0
    %391 = vmatpush1.msra.mxu0 %v222
    %392 = vmatprep.subr.mxu0 0.0
    %393 = vmatpush1.msra.mxu0 %v223
    %394 = vmatprep.subr.mxu0 0.0
    %395 = vmatpush1.msra.mxu0 %v224
    %396 = vmatprep.subr.mxu0 0.0
    %397 = vmatpush1.msra.mxu0 %v225
    %398 = vmatprep.subr.mxu0 0.0
    %399 = vmatpush1.msra.mxu0 %v226
    %400 = vmatprep.subr.mxu0 0.0
    %401 = vmatpush1.msra.mxu0 %v227
    %402 = vmatprep.subr.mxu0 0.0
    %403 = vmatpush1.msra.mxu0 0.0
    %404 = vmatprep.subr.mxu0 0.0
    %405 = vmatpush1.msra.mxu0 0.0
    %406 = vmatprep.subr.mxu0 0.0
    %407 = vmatpush1.msra.mxu0 0.0
    %408 = vmatprep.subr.mxu0 0.0
    %409 = vmatpush1.msra.mxu0 0.0
    %410 = vmatprep.subr.mxu0 0.0
    %411 = vmatpush1.msra.mxu0 0.0
    %412 = vmatprep.subr.mxu0 0.0
    %413 = vmatpush1.msra.mxu0 0.0
    %414 = vmatprep.subr.mxu0 0.0
    %415 = vmatpush1.msra.mxu0 0.0
    %416 = vmatprep.subr.mxu0 0.0
    %417 = vmatpush1.msra.mxu0 0.0
    %418 = vmatprep.subr.mxu0 0.0
    %419 = vmatpush1.msra.mxu0 0.0
    %420 = vmatprep.subr.mxu0 0.0
    %421 = vmatpush1.msra.mxu0 0.0
    %422 = vmatprep.subr.mxu0 0.0
    %423 = vmatpush1.msra.mxu0 0.0
    %424 = vmatprep.subr.mxu0 0.0
    %425 = vmatpush1.msra.mxu0 0.0
    %426 = vmatprep.subr.mxu0 0.0
    %427 = vmatpush1.msra.mxu0 0.0
    %428 = vmatprep.subr.mxu0 0.0
    %429 = vmatpush1.msra.mxu0 0.0
    %430 = vmatprep.subr.mxu0 0.0
    %431 = vmatpush1.msra.mxu0 0.0
    %432 = vmatprep.subr.mxu0 0.0
    %433 = vmatpush1.msra.mxu0 0.0
    %434 = vmatprep.mubr.f32.mxu0 0.0
    %435 = vmatmul.mubr.f32.gmra.mrb[0].mxu0 %v369
    %v436 = vpop.f32.mrb[0].mxu0
    %v437 = vadd.f32 %v184, %v436
    %v438 = vpop.f32.mrb[0].mxu0
    %439 = vdwg.mxu0
    %v440 = vtanh.pop %v437
    %441 = vmatprep.subr.mxu0 0.0
    %442 = vmatpush1.msra.mxu0 %v212
    %443 = vmatprep.subr.mxu0 0.0
    %444 = vmatpush1.msra.mxu0 %v213
    %445 = vmatprep.subr.mxu0 0.0
    %446 = vmatpush1.msra.mxu0 %v214
    %447 = vmatprep.subr.mxu0 0.0
    %448 = vmatpush1.msra.mxu0 %v215
    %449 = vmatprep.subr.mxu0 0.0
    %450 = vmatpush1.msra.mxu0 %v216
    %451 = vmatprep.subr.mxu0 0.0
    %452 = vmatpush1.msra.mxu0 %v217
    %453 = vmatprep.subr.mxu0 0.0
    %454 = vmatpush1.msra.mxu0 %v218
    %455 = vmatprep.subr.mxu0 0.0
    %456 = vmatpush1.msra.mxu0 %v219
    %457 = vmatprep.subr.mxu0 0.0
    %458 = vmatpush1.msra.mxu0 %v220
    %459 = vmatprep.subr.mxu0 0.0
    %460 = vmatpush1.msra.mxu0 %v221
    %461 = vmatprep.subr.mxu0 0.0
    %462 = vmatpush1.msra.mxu0 %v222
    %463 = vmatprep.subr.mxu0 0.0
    %464 = vmatpush1.msra.mxu0 %v223
    %465 = vmatprep.subr.mxu0 0.0
    %466 = vmatpush1.msra.mxu0 %v224
    %467 = vmatprep.subr.mxu0 0.0
    %468 = vmatpush1.msra.mxu0 %v225
    %469 = vmatprep.subr.mxu0 0.0
    %470 = vmatpush1.msra.mxu0 %v226
    %471 = vmatprep.subr.mxu0 0.0
    %472 = vmatpush1.msra.mxu0 %v227
    %473 = vmatprep.subr.mxu0 0.0
    %474 = vmatpush1.msra.mxu0 0.0
    %475 = vmatprep.subr.mxu0 0.0
    %476 = vmatpush1.msra.mxu0 0.0
    %477 = vmatprep.subr.mxu0 0.0
    %478 = vmatpush1.msra.mxu0 0.0
    %479 = vmatprep.subr.mxu0 0.0
    %480 = vmatpush1.msra.mxu0 0.0
    %481 = vmatprep.subr.mxu0 0.0
    %482 = vmatpush1.msra.mxu0 0.0
    %483 = vmatprep.subr.mxu0 0.0
    %484 = vmatpush1.msra.mxu0 0.0
    %485 = vmatprep.subr.mxu0 0.0
    %486 = vmatpush1.msra.mxu0 0.0
    %487 = vmatprep.subr.mxu0 0.0
    %488 = vmatpush1.msra.mxu0 0.0
    %489 = vmatprep.subr.mxu0 0.0
    %490 = vmatpush1.msra.mxu0 0.0
    %491 = vmatprep.subr.mxu0 0.0
    %492 = vmatpush1.msra.mxu0 0.0
    %493 = vmatprep.subr.mxu0 0.0
    %494 = vmatpush1.msra.mxu0 0.0
    %495 = vmatprep.subr.mxu0 0.0
    %496 = vmatpush1.msra.mxu0 0.0
    %497 = vmatprep.subr.mxu0 0.0
    %498 = vmatpush1.msra.mxu0 0.0
    %499 = vmatprep.subr.mxu0 0.0
    %500 = vmatpush1.msra.mxu0 0.0
    %501 = vmatprep.subr.mxu0 0.0
    %502 = vmatpush1.msra.mxu0 0.0
    %503 = vmatprep.subr.mxu0 0.0
    %504 = vmatpush1.msra.mxu0 0.0
    %505 = vmatprep.mubr.f32.mxu0 0.0
    %506 = vmatmul.mubr.f32.gmra.mrb[0].mxu0 %v440
    %v507 = vpop.f32.mrb[0].mxu0
    %v508 = vadd.f32 %v189, %v507
    %v509 = vpop.f32.mrb[0].mxu0
    %510 = vdwg.mxu0
    %v511 = vtanh.pop %v508
    %512 = vmatprep.subr.mxu0 0.0
    %513 = vmatpush1.msra.mxu0 %v212
    %514 = vmatprep.subr.mxu0 0.0
    %515 = vmatpush1.msra.mxu0 %v213
    %516 = vmatprep.subr.mxu0 0.0
    %517 = vmatpush1.msra.mxu0 %v214
    %518 = vmatprep.subr.mxu0 0.0
    %519 = vmatpush1.msra.mxu0 %v215
    %520 = vmatprep.subr.mxu0 0.0
    %521 = vmatpush1.msra.mxu0 %v216
    %522 = vmatprep.subr.mxu0 0.0
    %523 = vmatpush1.msra.mxu0 %v217
    %524 = vmatprep.subr.mxu0 0.0
    %525 = vmatpush1.msra.mxu0 %v218
    %526 = vmatprep.subr.mxu0 0.0
    %527 = vmatpush1.msra.mxu0 %v219
    %528 = vmatprep.subr.mxu0 0.0
    %529 = vmatpush1.msra.mxu0 %v220
    %530 = vmatprep.subr.mxu0 0.0
    %531 = vmatpush1.msra.mxu0 %v221
    %532 = vmatprep.subr.mxu0 0.0
    %533 = vmatpush1.msra.mxu0 %v222
    %534 = vmatprep.subr.mxu0 0.0
    %535 = vmatpush1.msra.mxu0 %v223
    %536 = vmatprep.subr.mxu0 0.0
    %537 = vmatpush1.msra.mxu0 %v224
    %538 = vmatprep.subr.mxu0 0.0
    %539 = vmatpush1.msra.mxu0 %v225
    %540 = vmatprep.subr.mxu0 0.0
    %541 = vmatpush1.msra.mxu0 %v226
    %542 = vmatprep.subr.mxu0 0.0
    %543 = vmatpush1.msra.mxu0 %v227
    %544 = vmatprep.subr.mxu0 0.0
    %545 = vmatpush1.msra.mxu0 0.0
    %546 = vmatprep.subr.mxu0 0.0
    %547 = vmatpush1.msra.mxu0 0.0
    %548 = vmatprep.subr.mxu0 0.0
    %549 = vmatpush1.msra.mxu0 0.0
    %550 = vmatprep.subr.mxu0 0.0
    %551 = vmatpush1.msra.mxu0 0.0
    %552 = vmatprep.subr.mxu0 0.0
    %553 = vmatpush1.msra.mxu0 0.0
    %554 = vmatprep.subr.mxu0 0.0
    %555 = vmatpush1.msra.mxu0 0.0
    %556 = vmatprep.subr.mxu0 0.0
    %557 = vmatpush1.msra.mxu0 0.0
    %558 = vmatprep.subr.mxu0 0.0
    %559 = vmatpush1.msra.mxu0 0.0
    %560 = vmatprep.subr.mxu0 0.0
    %561 = vmatpush1.msra.mxu0 0.0
    %562 = vmatprep.subr.mxu0 0.0
    %563 = vmatpush1.msra.mxu0 0.0
    %564 = vmatprep.subr.mxu0 0.0
    %565 = vmatpush1.msra.mxu0 0.0
    %566 = vmatprep.subr.mxu0 0.0
    %567 = vmatpush1.msra.mxu0 0.0
    %568 = vmatprep.subr.mxu0 0.0
    %569 = vmatpush1.msra.mxu0 0.0
    %570 = vmatprep.subr.mxu0 0.0
    %571 = vmatpush1.msra.mxu0 0.0
    %572 = vmatprep.subr.mxu0 0.0
    %573 = vmatpush1.msra.mxu0 0.0
    %574 = vmatprep.subr.mxu0 0.0
    %575 = vmatpush1.msra.mxu0 0.0
    %576 = vmatprep.mubr.f32.mxu0 0.0
    %577 = vmatmul.mubr.f32.gmra.mrb[0].mxu0 %v511
    %v578 = vpop.f32.mrb[0].mxu0
    %v579 = vadd.f32 %v194, %v578
    %v580 = vpop.f32.mrb[0].mxu0
    %581 = vdwg.mxu0
    %v582 = vtanh.pop %v579
    %583 = vmatprep.subr.mxu0 0.0
    %584 = vmatpush1.msra.mxu0 %v212
    %585 = vmatprep.subr.mxu0 0.0
    %586 = vmatpush1.msra.mxu0 %v213
    %587 = vmatprep.subr.mxu0 0.0
    %588 = vmatpush1.msra.mxu0 %v214
    %589 = vmatprep.subr.mxu0 0.0
    %590 = vmatpush1.msra.mxu0 %v215
    %591 = vmatprep.subr.mxu0 0.0
    %592 = vmatpush1.msra.mxu0 %v216
    %593 = vmatprep.subr.mxu0 0.0
    %594 = vmatpush1.msra.mxu0 %v217
    %595 = vmatprep.subr.mxu0 0.0
    %596 = vmatpush1.msra.mxu0 %v218
    %597 = vmatprep.subr.mxu0 0.0
    %598 = vmatpush1.msra.mxu0 %v219
    %599 = vmatprep.subr.mxu0 0.0
    %600 = vmatpush1.msra.mxu0 %v220
    %601 = vmatprep.subr.mxu0 0.0
    %602 = vmatpush1.msra.mxu0 %v221
    %603 = vmatprep.subr.mxu0 0.0
    %604 = vmatpush1.msra.mxu0 %v222
    %605 = vmatprep.subr.mxu0 0.0
    %606 = vmatpush1.msra.mxu0 %v223
    %607 = vmatprep.subr.mxu0 0.0
    %608 = vmatpush1.msra.mxu0 %v224
    %609 = vmatprep.subr.mxu0 0.0
    %610 = vmatpush1.msra.mxu0 %v225
    %611 = vmatprep.subr.mxu0 0.0
    %612 = vmatpush1.msra.mxu0 %v226
    %613 = vmatprep.subr.mxu0 0.0
    %614 = vmatpush1.msra.mxu0 %v227
    %615 = vmatprep.subr.mxu0 0.0
    %616 = vmatpush1.msra.mxu0 0.0
    %617 = vmatprep.subr.mxu0 0.0
    %618 = vmatpush1.msra.mxu0 0.0
    %619 = vmatprep.subr.mxu0 0.0
    %620 = vmatpush1.msra.mxu0 0.0
    %621 = vmatprep.subr.mxu0 0.0
    %622 = vmatpush1.msra.mxu0 0.0
    %623 = vmatprep.subr.mxu0 0.0
    %624 = vmatpush1.msra.mxu0 0.0
    %625 = vmatprep.subr.mxu0 0.0
    %626 = vmatpush1.msra.mxu0 0.0
    %627 = vmatprep.subr.mxu0 0.0
    %628 = vmatpush1.msra.mxu0 0.0
    %629 = vmatprep.subr.mxu0 0.0
    %630 = vmatpush1.msra.mxu0 0.0
    %631 = vmatprep.subr.mxu0 0.0
    %632 = vmatpush1.msra.mxu0 0.0
    %633 = vmatprep.subr.mxu0 0.0
    %634 = vmatpush1.msra.mxu0 0.0
    %635 = vmatprep.subr.mxu0 0.0
    %636 = vmatpush1.msra.mxu0 0.0
    %637 = vmatprep.subr.mxu0 0.0
    %638 = vmatpush1.msra.mxu0 0.0
    %639 = vmatprep.subr.mxu0 0.0
    %640 = vmatpush1.msra.mxu0 0.0
    %641 = vmatprep.subr.mxu0 0.0
    %642 = vmatpush1.msra.mxu0 0.0
    %643 = vmatprep.subr.mxu0 0.0
    %644 = vmatpush1.msra.mxu0 0.0
    %645 = vmatprep.subr.mxu0 0.0
    %646 = vmatpush1.msra.mxu0 0.0
    %647 = vmatprep.mubr.f32.mxu0 0.0
    %648 = vmatmul.mubr.f32.gmra.mrb[0].mxu0 %v582
    %v649 = vpop.f32.mrb[0].mxu0
    %v650 = vadd.f32 %v199, %v649
    %v651 = vpop.f32.mrb[0].mxu0
    %652 = vdwg.mxu0
    %v653 = vtanh.pop %v650
    %654 = vmatprep.subr.mxu0 0.0
    %655 = vmatpush1.msra.mxu0 %v212
    %656 = vmatprep.subr.mxu0 0.0
    %657 = vmatpush1.msra.mxu0 %v213
    %658 = vmatprep.subr.mxu0 0.0
    %659 = vmatpush1.msra.mxu0 %v214
    %660 = vmatprep.subr.mxu0 0.0
    %661 = vmatpush1.msra.mxu0 %v215
    %662 = vmatprep.subr.mxu0 0.0
    %663 = vmatpush1.msra.mxu0 %v216
    %664 = vmatprep.subr.mxu0 0.0
    %665 = vmatpush1.msra.mxu0 %v217
    %666 = vmatprep.subr.mxu0 0.0
    %667 = vmatpush1.msra.mxu0 %v218
    %668 = vmatprep.subr.mxu0 0.0
    %669 = vmatpush1.msra.mxu0 %v219
    %670 = vmatprep.subr.mxu0 0.0
    %671 = vmatpush1.msra.mxu0 %v220
    %672 = vmatprep.subr.mxu0 0.0
    %673 = vmatpush1.msra.mxu0 %v221
    %674 = vmatprep.subr.mxu0 0.0
    %675 = vmatpush1.msra.mxu0 %v222
    %676 = vmatprep.subr.mxu0 0.0
    %677 = vmatpush1.msra.mxu0 %v223
    %678 = vmatprep.subr.mxu0 0.0
    %679 = vmatpush1.msra.mxu0 %v224
    %680 = vmatprep.subr.mxu0 0.0
    %681 = vmatpush1.msra.mxu0 %v225
    %682 = vmatprep.subr.mxu0 0.0
    %683 = vmatpush1.msra.mxu0 %v226
    %684 = vmatprep.subr.mxu0 0.0
    %685 = vmatpush1.msra.mxu0 %v227
    %686 = vmatprep.subr.mxu0 0.0
    %687 = vmatpush1.msra.mxu0 0.0
    %688 = vmatprep.subr.mxu0 0.0
    %689 = vmatpush1.msra.mxu0 0.0
    %690 = vmatprep.subr.mxu0 0.0
    %691 = vmatpush1.msra.mxu0 0.0
    %692 = vmatprep.subr.mxu0 0.0
    %693 = vmatpush1.msra.mxu0 0.0
    %694 = vmatprep.subr.mxu0 0.0
    %695 = vmatpush1.msra.mxu0 0.0
    %696 = vmatprep.subr.mxu0 0.0
    %697 = vmatpush1.msra.mxu0 0.0
    %698 = vmatprep.subr.mxu0 0.0
    %699 = vmatpush1.msra.mxu0 0.0
    %700 = vmatprep.subr.mxu0 0.0
    %701 = vmatpush1.msra.mxu0 0.0
    %702 = vmatprep.subr.mxu0 0.0
    %703 = vmatpush1.msra.mxu0 0.0
    %704 = vmatprep.subr.mxu0 0.0
    %705 = vmatpush1.msra.mxu0 0.0
    %706 = vmatprep.subr.mxu0 0.0
    %707 = vmatpush1.msra.mxu0 0.0
    %708 = vmatprep.subr.mxu0 0.0
    %709 = vmatpush1.msra.mxu0 0.0
    %710 = vmatprep.subr.mxu0 0.0
    %711 = vmatpush1.msra.mxu0 0.0
    %712 = vmatprep.subr.mxu0 0.0
    %713 = vmatpush1.msra.mxu0 0.0
    %714 = vmatprep.subr.mxu0 0.0
    %715 = vmatpush1.msra.mxu0 0.0
    %716 = vmatprep.subr.mxu0 0.0
    %717 = vmatpush1.msra.mxu0 0.0
    %718 = vmatprep.mubr.f32.mxu0 0.0
    %719 = vmatmul.mubr.f32.gmra.mrb[0].mxu0 %v653
    %v720 = vpop.f32.mrb[0].mxu0
    %v721 = vadd.f32 %v204, %v720
    %v722 = vpop.f32.mrb[0].mxu0
    %723 = vdwg.mxu0
    %v724 = vtanh.pop %v721
    %725 = vmatprep.subr.mxu0 0.0
    %726 = vmatpush1.msra.mxu0 %v212
    %727 = vmatprep.subr.mxu0 0.0
    %728 = vmatpush1.msra.mxu0 %v213
    %729 = vmatprep.subr.mxu0 0.0
    %730 = vmatpush1.msra.mxu0 %v214
    %731 = vmatprep.subr.mxu0 0.0
    %732 = vmatpush1.msra.mxu0 %v215
    %733 = vmatprep.subr.mxu0 0.0
    %734 = vmatpush1.msra.mxu0 %v216
    %735 = vmatprep.subr.mxu0 0.0
    %736 = vmatpush1.msra.mxu0 %v217
    %737 = vmatprep.subr.mxu0 0.0
    %738 = vmatpush1.msra.mxu0 %v218
    %739 = vmatprep.subr.mxu0 0.0
    %740 = vmatpush1.msra.mxu0 %v219
    %741 = vmatprep.subr.mxu0 0.0
    %742 = vmatpush1.msra.mxu0 %v220
    %743 = vmatprep.subr.mxu0 0.0
    %744 = vmatpush1.msra.mxu0 %v221
    %745 = vmatprep.subr.mxu0 0.0
    %746 = vmatpush1.msra.mxu0 %v222
    %747 = vmatprep.subr.mxu0 0.0
    %748 = vmatpush1.msra.mxu0 %v223
    %749 = vmatprep.subr.mxu0 0.0
    %750 = vmatpush1.msra.mxu0 %v224
    %751 = vmatprep.subr.mxu0 0.0
    %752 = vmatpush1.msra.mxu0 %v225
    %753 = vmatprep.subr.mxu0 0.0
    %754 = vmatpush1.msra.mxu0 %v226
    %755 = vmatprep.subr.mxu0 0.0
    %756 = vmatpush1.msra.mxu0 %v227
    %757 = vmatprep.subr.mxu0 0.0
    %758 = vmatpush1.msra.mxu0 0.0
    %759 = vmatprep.subr.mxu0 0.0
    %760 = vmatpush1.msra.mxu0 0.0
    %761 = vmatprep.subr.mxu0 0.0
    %762 = vmatpush1.msra.mxu0 0.0
    %763 = vmatprep.subr.mxu0 0.0
    %764 = vmatpush1.msra.mxu0 0.0
    %765 = vmatprep.subr.mxu0 0.0
    %766 = vmatpush1.msra.mxu0 0.0
    %767 = vmatprep.subr.mxu0 0.0
    %768 = vmatpush1.msra.mxu0 0.0
    %769 = vmatprep.subr.mxu0 0.0
    %770 = vmatpush1.msra.mxu0 0.0
    %771 = vmatprep.subr.mxu0 0.0
    %772 = vmatpush1.msra.mxu0 0.0
    %773 = vmatprep.subr.mxu0 0.0
    %774 = vmatpush1.msra.mxu0 0.0
    %775 = vmatprep.subr.mxu0 0.0
    %776 = vmatpush1.msra.mxu0 0.0
    %777 = vmatprep.subr.mxu0 0.0
    %778 = vmatpush1.msra.mxu0 0.0
    %779 = vmatprep.subr.mxu0 0.0
    %780 = vmatpush1.msra.mxu0 0.0
    %781 = vmatprep.subr.mxu0 0.0
    %782 = vmatpush1.msra.mxu0 0.0
    %783 = vmatprep.subr.mxu0 0.0
    %784 = vmatpush1.msra.mxu0 0.0
    %785 = vmatprep.subr.mxu0 0.0
    %786 = vmatpush1.msra.mxu0 0.0
    %787 = vmatprep.subr.mxu0 0.0
    %788 = vmatpush1.msra.mxu0 0.0
    %789 = vmatprep.mubr.f32.mxu0 0.0
    %790 = vmatmul.mubr.f32.gmra.mrb[0].mxu0 %v724
    %v791 = vpop.f32.mrb[0].mxu0
    %v792 = vadd.f32 %v209, %v791
    %v793 = vpop.f32.mrb[0].mxu0
    %794 = vdwg.mxu0
    %v795 = vtanh.pop %v792
    %796 = vst [vmem:[#allocation8] sm:$0xff] %v795
    // Predicated region
    $region30: #{tpu_custom_call.1} parent=1 // pred_check
      _
    $region31: #{tpu_custom_call.1} parent=1 // pred_check_branch
      %798 = sbr.rel (0) target = $region33
    $region32: #{tpu_custom_call.1} parent=1 // pred_region
      %s800 = ssub.s32 128, 128
      %801 = vsyncadd [#allocation4], %s800
      %s803 = sshll.u32 [#allocation8], 4
      %s804 = int_to_ptr.vmem [resolvable:$true] %s803
      %806 = dma.vmem_to_hbm [thread:$0]  %s804, 128, %s4, [#allocation4]
    $region33: #{tpu_custom_call.1} parent=1 // pred_fallthru
      _
    // Predicated region
    $region34: #{tpu_custom_call.1} parent=1 // pred_check
      _
    $region35: #{tpu_custom_call.1} parent=1 // pred_check_branch
      %808 = sbr.rel (0) target = $region37
    $region36: #{tpu_custom_call.1} parent=1 // pred_region
      %809 = dma.done [#allocation4], 128
    $region37: #{tpu_custom_call.1} parent=1 // pred_fallthru
      _
    %810 = vsyncpa [#allocation3], 1
    %811 = vsyncpa [#allocation6], 1
    %812 = vsyncpa [#allocation4], 1

</llo_original>
